<compile_context>
chip_gen: v7x
topology: tpu7x:2x2x1
jax: 0.10.0
libtpu: 0.0.40
codegen_flags: <defaults>
</compile_context>

<pallas_src>
import jax
import jax.numpy as jnp
from jax import lax
from jax.experimental import pallas as pl
from jax.experimental.pallas import tpu as pltpu


def _round_up(x, m):
    return (x + m - 1) // m * m


def outconv_kernel(x_ref, w_ref, b_ref, o_ref):
    # x_ref: [Cin, T]  (channels on sublanes, pixels on lanes)
    # w_ref: [Cout, Cin], b_ref: [Cout, 1], o_ref: [Cout, T]
    x = x_ref[...]
    w = w_ref[...]
    cin = x_ref.shape[0]

    if cin >= 8 and cin % 8 == 0:
        # MXU path for well-aligned channel counts.
        y = lax.dot_general(
            w, x,
            dimension_numbers=(((1,), (0,)), ((), ())),
            preferred_element_type=jnp.float32,
        )
    else:
        # Tiny contraction (e.g. Cin=4): unrolled outer-product accumulation on the
        # VPU.  The kernel is memory-bound, so compute choice is invisible here.
        y = w[:, 0:1] * x[0:1, :]
        for i in range(1, cin):
            y = y + w[:, i:i + 1] * x[i:i + 1, :]

    o_ref[...] = (y + b_ref[...]).astype(o_ref.dtype)


def out_conv(x, weight, bias, *, t_hw=8192):
    """OutConv forward: y = Conv2d(kernel_size=1)(x).

    x: [N, Cin, H, W] (NCHW), weight: [Cout, Cin, 1, 1], bias: [Cout].
    Returns [N, Cout, H, W] (NCHW).
    """
    N, Cin, H, W = x.shape
    Cout = weight.shape[0]
    HW = H * W

    # Layout-free reshapes from/to NCHW (no wrapper transposes, no HBM round-trips).
    X = x.reshape(N, Cin, HW).astype(jnp.float32)        # [N, Cin, HW]
    Wm = weight.reshape(Cout, Cin).astype(jnp.float32)   # [Cout, Cin]
    b = bias.reshape(Cout, 1).astype(jnp.float32)        # [Cout, 1]

    # Pixel tile on the lane axis: multiple of 128, as large as reasonable.
    T = _round_up(min(t_hw, _round_up(HW, 128)), 128)
    HWp = _round_up(HW, T)
    if HWp != HW:
        # Only hit when HW isn't tile-aligned; padded pixels are sliced off below.
        X = jnp.pad(X, ((0, 0), (0, 0), (0, HWp - HW)))

    grid = (N, HWp // T)

    out = pl.pallas_call(
        outconv_kernel,
        out_shape=jax.ShapeDtypeStruct((N, Cout, HWp), jnp.float32),
        grid=grid,
        in_specs=[
            pl.BlockSpec((None, Cin, T), lambda n, j: (n, 0, j)),   # activations
            pl.BlockSpec((Cout, Cin), lambda n, j: (0, 0)),         # tiny weight
            pl.BlockSpec((Cout, 1), lambda n, j: (0, 0)),           # bias column
        ],
        out_specs=pl.BlockSpec((None, Cout, T), lambda n, j: (n, 0, j)),
        compiler_params=pltpu.CompilerParams(
            dimension_semantics=("parallel", "parallel"),   # independent tiles
            vmem_limit_bytes=32 * 1024 * 1024,              # v7x-safe; blocks are tiny
        ),
        cost_estimate=pl.CostEstimate(
            flops=2 * N * HW * Cin * Cout,
            transcendentals=0,
            bytes_accessed=4 * (N * Cin * HW + Cin * Cout + Cout + N * Cout * HW),
        ),
    )(X, Wm, b)

    return out[:, :, :HW].reshape(N, Cout, H, W)   # layout-free back to NCHW


def reference(x, weight, bias):
    y = lax.conv_general_dilated(
        x, weight,
        window_strides=(1, 1),
        padding=[(0, 0), (0, 0)],
        dimension_numbers=("NCHW", "OIHW", "NCHW"),
    )
    return y + bias.reshape(1, -1, 1, 1)


if __name__ == "__main__":
    # OutConv(in_channels=4, out_channels=8); x: [2, 4, 16, 16]
    in_channels, out_channels = 4, 8

    key = jax.random.PRNGKey(0)
    kx, kw, kb = jax.random.split(key, 3)
    x = jax.random.normal(kx, (2, in_channels, 16, 16), dtype=jnp.float32)
    weight = 0.1 * jax.random.normal(
        kw, (out_channels, in_channels, 1, 1), dtype=jnp.float32)
    bias = 0.1 * jax.random.normal(kb, (out_channels,), dtype=jnp.float32)

    out = out_conv(x, weight, bias)
    out = jax.block_until_ready(out)

    ref = reference(x, weight, bias)
    assert out.shape == (2, out_channels, 16, 16)
    assert jnp.allclose(out, ref, atol=1e-5, rtol=1e-5)

    print("KERNEL_OK")
</pallas_src>

<mosaic_0001>
module attributes {stable_mosaic.version = 11 : i64} {
  func.func @outconv_kernel(%arg0: i32, %arg1: i32, %arg2: memref<1x4x256xf32, #tpu.memory_space<vmem>>, %arg3: memref<8x4xf32, #tpu.memory_space<vmem>>, %arg4: memref<8x1xf32, #tpu.memory_space<vmem>>, %arg5: memref<1x8x256xf32, #tpu.memory_space<vmem>>) attributes {dimension_semantics = [#tpu.dimension_semantics<parallel>, #tpu.dimension_semantics<parallel>], iteration_bounds = array<i64: 2, 1>, scalar_prefetch = 0 : i64, scratch_operands = 0 : i64, tpu.core_type = #tpu.core_type<tc>, window_params = [{transform_indices = @transform_0, window_bounds = array<i64: 1, 4, 256>}, {pipeline_mode = #tpu.pipeline_mode<synchronous>, transform_indices = @transform_1, window_bounds = array<i64: 8, 4>}, {pipeline_mode = #tpu.pipeline_mode<synchronous>, transform_indices = @transform_2, window_bounds = array<i64: 8, 1>}, {transform_indices = @transform_3, window_bounds = array<i64: 1, 8, 256>}]} {
    %c0 = arith.constant 0 : index
    %c0_0 = arith.constant 0 : index
    %c0_1 = arith.constant 0 : index
    %0 = vector.load %arg2[%c0, %c0_0, %c0_1] : memref<1x4x256xf32, #tpu.memory_space<vmem>>, vector<1x4x256xf32>
    %1 = vector.shape_cast %0 : vector<1x4x256xf32> to vector<4x256xf32>
    %c0_2 = arith.constant 0 : index
    %c0_3 = arith.constant 0 : index
    %2 = vector.load %arg3[%c0_2, %c0_3] : memref<8x4xf32, #tpu.memory_space<vmem>>, vector<8x4xf32>
    %3 = vector.extract_strided_slice %2 {offsets = [0, 0], sizes = [8, 1], strides = [1, 1]} : vector<8x4xf32> to vector<8x1xf32>
    %4 = vector.extract_strided_slice %1 {offsets = [0, 0], sizes = [1, 256], strides = [1, 1]} : vector<4x256xf32> to vector<1x256xf32>
    %5 = vector.broadcast %3 : vector<8x1xf32> to vector<8x256xf32>
    %6 = vector.broadcast %4 : vector<1x256xf32> to vector<8x256xf32>
    %7 = arith.mulf %5, %6 : vector<8x256xf32>
    %8 = vector.extract_strided_slice %2 {offsets = [0, 1], sizes = [8, 1], strides = [1, 1]} : vector<8x4xf32> to vector<8x1xf32>
    %9 = vector.extract_strided_slice %1 {offsets = [1, 0], sizes = [1, 256], strides = [1, 1]} : vector<4x256xf32> to vector<1x256xf32>
    %10 = vector.broadcast %8 : vector<8x1xf32> to vector<8x256xf32>
    %11 = vector.broadcast %9 : vector<1x256xf32> to vector<8x256xf32>
    %12 = arith.mulf %10, %11 : vector<8x256xf32>
    %13 = arith.addf %7, %12 : vector<8x256xf32>
    %14 = vector.extract_strided_slice %2 {offsets = [0, 2], sizes = [8, 1], strides = [1, 1]} : vector<8x4xf32> to vector<8x1xf32>
    %15 = vector.extract_strided_slice %1 {offsets = [2, 0], sizes = [1, 256], strides = [1, 1]} : vector<4x256xf32> to vector<1x256xf32>
    %16 = vector.broadcast %14 : vector<8x1xf32> to vector<8x256xf32>
    %17 = vector.broadcast %15 : vector<1x256xf32> to vector<8x256xf32>
    %18 = arith.mulf %16, %17 : vector<8x256xf32>
    %19 = arith.addf %13, %18 : vector<8x256xf32>
    %20 = vector.extract_strided_slice %2 {offsets = [0, 3], sizes = [8, 1], strides = [1, 1]} : vector<8x4xf32> to vector<8x1xf32>
    %21 = vector.extract_strided_slice %1 {offsets = [3, 0], sizes = [1, 256], strides = [1, 1]} : vector<4x256xf32> to vector<1x256xf32>
    %22 = vector.broadcast %20 : vector<8x1xf32> to vector<8x256xf32>
    %23 = vector.broadcast %21 : vector<1x256xf32> to vector<8x256xf32>
    %24 = arith.mulf %22, %23 : vector<8x256xf32>
    %25 = arith.addf %19, %24 : vector<8x256xf32>
    %c0_4 = arith.constant 0 : index
    %c0_5 = arith.constant 0 : index
    %26 = vector.load %arg4[%c0_4, %c0_5] : memref<8x1xf32, #tpu.memory_space<vmem>>, vector<8x1xf32>
    %27 = vector.broadcast %26 : vector<8x1xf32> to vector<8x256xf32>
    %28 = arith.addf %25, %27 : vector<8x256xf32>
    %c0_6 = arith.constant 0 : index
    %c0_7 = arith.constant 0 : index
    %c0_8 = arith.constant 0 : index
    %29 = vector.load %arg5[%c0_6, %c0_7, %c0_8] : memref<1x8x256xf32, #tpu.memory_space<vmem>>, vector<1x8x256xf32>
    %30 = vector.shape_cast %29 : vector<1x8x256xf32> to vector<8x256xf32>
    %31 = vector.shape_cast %28 : vector<8x256xf32> to vector<1x8x256xf32>
    tpu.vector_store %arg5[%c0_6, %c0_7, %c0_8], %31 {strides = array<i32>} : memref<1x8x256xf32, #tpu.memory_space<vmem>>, vector<1x8x256xf32>,
    return
  }
  func.func @transform_0(%arg0: i32, %arg1: i32) -> (i32, i32, i32) {
    %c0_i32 = arith.constant 0 : i32
    %c0_i32_0 = arith.constant 0 : i32
    return %arg0, %c0_i32, %arg1 : i32, i32, i32
  }
  func.func @transform_1(%arg0: i32, %arg1: i32) -> (i32, i32) {
    %c0_i32 = arith.constant 0 : i32
    %c0_i32_0 = arith.constant 0 : i32
    %c0_i32_1 = arith.constant 0 : i32
    return %c0_i32, %c0_i32_0 : i32, i32
  }
  func.func @transform_2(%arg0: i32, %arg1: i32) -> (i32, i32) {
    %c0_i32 = arith.constant 0 : i32
    %c0_i32_0 = arith.constant 0 : i32
    %c0_i32_1 = arith.constant 0 : i32
    return %c0_i32, %c0_i32_0 : i32, i32
  }
  func.func @transform_3(%arg0: i32, %arg1: i32) -> (i32, i32, i32) {
    %c0_i32 = arith.constant 0 : i32
    %c0_i32_0 = arith.constant 0 : i32
    return %arg0, %c0_i32, %arg1 : i32, i32, i32
  }
}

</mosaic_0001>

<llo_original>
// kernel: tpu_custom_call.1
$region0: #{tpu_custom_call.1}
  #allocation0 [shape = 'u32[]', space=smem, size = 0x4, offset = 0x4, fixed_abs, tag = 'smem constant byte address 0x4 - core index']
  #allocation1 [shape = 'u32[144,128]{1,0:T(1,128)}', space=vmem, size = 0x12000, scoped, tag = 'internal scratch']
  %s0 = inlined_call_operand.vmem [shape: f32[2,4,256], index: 0, kind: input, shape index: {}]
  %s1 = inlined_call_operand.vmem [shape: f32[8,4], index: 1, kind: input, shape index: {}]
  %s2 = inlined_call_operand.vmem [shape: f32[8,1], index: 2, kind: input, shape index: {}]
  %s3 = inlined_call_operand.hbm [shape: f32[2,8,256], index: 3, kind: output, shape index: {}]
  %s4 = sld [smem:[#allocation0]]
  $region45: #{tpu_custom_call.1} parent=0
    _
  %s6 = ssub.s32 1, %s4
  %s7 = scalar_select 0, %s6, %s4
  $region1: #{tpu_custom_call.1} parent=0
    #allocation2 [shape = 'u8[16384]{0}', space=vmem, size = 0x4000, scoped, tag = 'output window, operand 0']
    #allocation3 [shape = 's32[2]{0}', space=sflag, size = 0x8, scoped, tag = 'scoped memory for tpu_custom_call.1']
    %8 = vsyncpa [#allocation3], 0
    %s9 = scalar_lea.sflag [#allocation3], 1
    %10 = vsyncpa %s9, 0
    loop: start=0, step=1, limit=4
    $region2: #{tpu_custom_call.1} parent=1 // loop_pre_header
      _
    $region3: #{tpu_custom_call.1} parent=1 // loop_header
      %s12 = sphi 0, %s16
      %p13 = scmp.ge.s32.totalorder %s12, 4
      %s19 = sphi 0, %s31
      %s20 = sphi 0, %s27
      %s21 = sphi 0, %s19
      %s22 = sphi 0, %s20
      %s23 = sphi 0, %s21
      %s24 = sphi 0, %s22
      %s36 = sphi 0, %s38
      %s39 = sphi 0, %s36
      %s40 = sphi 0, %s39
      %s56 = sphi 0, %s40
      %s60 = sphi 0, %s60
      %s62 = sphi 0, %s60
      %s63 = sphi 0, %s62
      %s77 = sphi 0, %s63
      %s81 = sphi 0, %s81
      %s83 = sphi 0, %s81
      %s84 = sphi 0, %s83
      %s98 = sphi 0, %s84
      %s106 = sphi 0, %s108
      %s109 = sphi 0, %s106
      %s110 = sphi 0, %s109
      %s126 = sphi 0, %s110
    $region4: #{tpu_custom_call.1} parent=1 // loop_header_branch
      %15 = sbr.rel (%p13) target = $region8
    $region5: #{tpu_custom_call.1} parent=1 // loop_body
      %s17 = ssub.s32 %s12, 1
      %s18 = ssub.s32 %s12, 2
      %s25 = sadd.s32 1, %s20
      %p26 = scmp.ge.s32.totalorder %s25, 1
      %s27 = scalar_select %p26, 0, %s25
      %s28 = sadd.s32 1, %s19
      %s29 = scalar_select %p26, %s28, %s19
      %p30 = scmp.ge.s32.totalorder %s29, 2
      %s31 = scalar_select %p30, 0, %s29
      %s32 = ssub.s32 %s19, %s31
      %s33 = ssub.s32 %s20, %s27
      %s34 = sor.u32 %s32, %s33
      %p35 = scmp.eq.s32.totalorder %s34, 0
      %s37 = sadd.s32 %s36, 1
      %s38 = scalar_select %p35, %s36, %s37
      %p41 = pneg %p35
      %p42 = scmp.eq.s32.totalorder %s12, 1
      %p43 = por %p41, %p42
      %p44 = scmp.ne.s32.totalorder %s36, %s39
      %p45 = scmp.eq.s32.totalorder %s12, 0
      %p46 = por %p44, %p45
      %p47 = scmp.ne.s32.totalorder %s36, %s39
      %p48 = scmp.eq.s32.totalorder %s17, 1
      %p49 = por %p47, %p48
      %p50 = scmp.ne.s32.totalorder %s39, %s40
      %p51 = scmp.eq.s32.totalorder %s17, 0
      %p52 = por %p50, %p51
      %p53 = scmp.ne.s32.totalorder %s39, %s40
      %p54 = scmp.eq.s32.totalorder %s18, 1
      %p55 = por %p53, %p54
      %p57 = scmp.ne.s32.totalorder %s40, %s56
      %p58 = scmp.eq.s32.totalorder %s18, 0
      %p59 = por %p57, %p58
      %s61 = sadd.s32 %s60, 1
      %p64 = scmp.eq.s32.totalorder %s12, 1
      %p65 = scmp.ne.s32.totalorder %s60, %s62
      %p66 = scmp.eq.s32.totalorder %s12, 0
      %p67 = por %p65, %p66
      %p68 = scmp.ne.s32.totalorder %s60, %s62
      %p69 = scmp.eq.s32.totalorder %s17, 1
      %p70 = por %p68, %p69
      %p71 = scmp.ne.s32.totalorder %s62, %s63
      %p72 = scmp.eq.s32.totalorder %s17, 0
      %p73 = por %p71, %p72
      %p74 = scmp.ne.s32.totalorder %s62, %s63
      %p75 = scmp.eq.s32.totalorder %s18, 1
      %p76 = por %p74, %p75
      %p78 = scmp.ne.s32.totalorder %s63, %s77
      %p79 = scmp.eq.s32.totalorder %s18, 0
      %p80 = por %p78, %p79
      %s82 = sadd.s32 %s81, 1
      %p85 = scmp.eq.s32.totalorder %s12, 1
      %p86 = scmp.ne.s32.totalorder %s81, %s83
      %p87 = scmp.eq.s32.totalorder %s12, 0
      %p88 = por %p86, %p87
      %p89 = scmp.ne.s32.totalorder %s81, %s83
      %p90 = scmp.eq.s32.totalorder %s17, 1
      %p91 = por %p89, %p90
      %p92 = scmp.ne.s32.totalorder %s83, %s84
      %p93 = scmp.eq.s32.totalorder %s17, 0
      %p94 = por %p92, %p93
      %p95 = scmp.ne.s32.totalorder %s83, %s84
      %p96 = scmp.eq.s32.totalorder %s18, 1
      %p97 = por %p95, %p96
      %p99 = scmp.ne.s32.totalorder %s84, %s98
      %p100 = scmp.eq.s32.totalorder %s18, 0
      %p101 = por %p99, %p100
      %s102 = ssub.s32 %s19, %s31
      %s103 = ssub.s32 %s20, %s27
      %s104 = sor.u32 %s102, %s103
      %p105 = scmp.eq.s32.totalorder %s104, 0
      %s107 = sadd.s32 %s106, 1
      %s108 = scalar_select %p105, %s106, %s107
      %p111 = pneg %p105
      %p112 = scmp.eq.s32.totalorder %s12, 1
      %p113 = por %p111, %p112
      %p114 = scmp.ne.s32.totalorder %s106, %s109
      %p115 = scmp.eq.s32.totalorder %s12, 0
      %p116 = por %p114, %p115
      %p117 = scmp.ne.s32.totalorder %s106, %s109
      %p118 = scmp.eq.s32.totalorder %s17, 1
      %p119 = por %p117, %p118
      %p120 = scmp.ne.s32.totalorder %s109, %s110
      %p121 = scmp.eq.s32.totalorder %s17, 0
      %p122 = por %p120, %p121
      %p123 = scmp.ne.s32.totalorder %s109, %s110
      %p124 = scmp.eq.s32.totalorder %s18, 1
      %p125 = por %p123, %p124
      %p127 = scmp.ne.s32.totalorder %s110, %s126
      %p128 = scmp.eq.s32.totalorder %s18, 0
      %p129 = por %p127, %p128
      %p130 = scmp.le.s32.totalorder 1, %s12
      %p131 = scmp.lt.s32.totalorder %s12, 3
      %p132 = pnand %p130, %p131
      %p133 = pneg %p132
      // Predicated region
      $region9: #{tpu_custom_call.1} parent=5 // pred_check
        _
      $region10: #{tpu_custom_call.1} parent=5 // pred_check_branch
        %135 = sbr.rel (%p132) target = $region12
      $region11: #{tpu_custom_call.1} parent=5 // pred_region
        %s136 = ssub.s32 %s12, 1
        // Predicated region
        $region13: #{tpu_custom_call.1} parent=11 // pred_check
          %p137 = pneg %p73
        $region14: #{tpu_custom_call.1} parent=11 // pred_check_branch
          %139 = sbr.rel (%p137) target = $region16
        $region15: #{tpu_custom_call.1} parent=11 // pred_region
          _
        $region16: #{tpu_custom_call.1} parent=11 // pred_fallthru
          _
        // Predicated region
        $region17: #{tpu_custom_call.1} parent=11 // pred_check
          %p140 = pneg %p94
        $region18: #{tpu_custom_call.1} parent=11 // pred_check_branch
          %142 = sbr.rel (%p140) target = $region20
        $region19: #{tpu_custom_call.1} parent=11 // pred_region
          _
        $region20: #{tpu_custom_call.1} parent=11 // pred_fallthru
          _
      $region12: #{tpu_custom_call.1} parent=5 // pred_fallthru
        _
      %p143 = scmp.lt.s32.totalorder %s12, 2
      // Predicated region
      $region21: #{tpu_custom_call.1} parent=5 // pred_check
        %p144 = pneg %p143
      $region22: #{tpu_custom_call.1} parent=5 // pred_check_branch
        %146 = sbr.rel (%p144) target = $region24
      $region23: #{tpu_custom_call.1} parent=5 // pred_region
        // Predicated region
        $region25: #{tpu_custom_call.1} parent=23 // pred_check
          %p147 = pneg %p46
        $region26: #{tpu_custom_call.1} parent=23 // pred_check_branch
          %149 = sbr.rel (%p147) target = $region28
        $region27: #{tpu_custom_call.1} parent=23 // pred_region
          %s150 = smul.u32 2, %s20
          %p151 = scmp.lt.s32.totalorder %s19, 1
          %s152 = scalar_select %p151, %s19, 1
          %p153 = scmp.lt.s32.totalorder %s150, 1
          %s154 = scalar_select %p153, %s150, 1
          %s155 = smul.addr %s152, 2
          %s156 = sadd.s32 %s154, %s155
          %s157 = smul.addr %s156, 4
          %s158 = scalar_lea.vmem %s0, %s157
          %s159 = smul.u32 2, %s20
        $region28: #{tpu_custom_call.1} parent=23 // pred_fallthru
          _
      $region24: #{tpu_custom_call.1} parent=5 // pred_fallthru
        _
      %p160 = scmp.le.s32.totalorder 1, %s12
      %p161 = scmp.lt.s32.totalorder %s12, 3
      %p162 = pnand %p160, %p161
      %p163 = pneg %p162
      // Predicated region
      $region29: #{tpu_custom_call.1} parent=5 // pred_check
        _
      $region30: #{tpu_custom_call.1} parent=5 // pred_check_branch
        %165 = sbr.rel (%p162) target = $region32
      $region31: #{tpu_custom_call.1} parent=5 // pred_region
        %s166 = ssub.s32 %s12, 1
        %s167 = smul.u32 2, %s22
        %p168 = scmp.lt.s32.totalorder %s21, 1
        %s169 = scalar_select %p168, %s21, 1
        %p170 = scmp.lt.s32.totalorder %s167, 1
        %s171 = scalar_select %p170, %s167, 1
        %s172 = smul.addr %s169, 2
        %s173 = sadd.s32 %s171, %s172
        %s174 = smul.addr %s173, 4
        %s175 = scalar_lea.vmem %s0, %s174
        %p176 = pneg %p52
        %p177 = pneg %p49
        %p178 = pneg %p73
        %p179 = pneg %p70
        %p180 = pneg %p94
        %p181 = pneg %p91
        %p182 = pneg %p122
        %p183 = pneg %p119
        %s184 = sand.u32 %s109, 1
        %s185 = scalar_lea.sflag [#allocation3], %s184
        %s186 = sand.u32 %s109, 1
        %s187 = smul.addr %s186, 16
        %s188 = scalar_lea.vmem [#allocation2], %s187
        %s189 = smul.u32 2, %s22
        %p190 = scmp.lt.s32.totalorder %s21, 1
        %s191 = scalar_select %p190, %s21, 1
        %p192 = scmp.lt.s32.totalorder %s189, 1
        %s193 = scalar_select %p192, %s189, 1
        %s194 = smul.addr %s191, 2
        %s195 = sadd.s32 %s193, %s194
        %s196 = smul.addr %s195, 4
        %s197 = scalar_lea.vmem %s0, %s196
        %s198 = smul.u32 2, %s22
        %s199 = smul.u32 2, %s22
        %v200 = vld [vmem:[%s197] sm:$0xff]
        %v201 = vld [vmem:[%s1] sm:$0xff]
        %203 = vset.pattern.permute.xlu0 0
        %204 = vperm.xlu0 %203, %v201
        %v205 = vpop.permute.xlu0 %204
        %v208 = vlaneseq
        %v209 = vshrl.u32 %v208, 7
        %v210 = vsub.s32 0, %v209
        %v211 = vrot.slane %v200, %v210
        %v212 = vlaneseq
        %v213 = vshrl.u32 %v212, 7
        %v214 = vsub.s32 4, %v213
        %v215 = vrot.slane %v200, %v214
        %v218 = vlaneseq
        %v219 = vshrl.u32 %v218, 7
        %v220 = vsub.s32 0, %v219
        %v221 = vrot.slane %v211, %v220
        %v222 = vlaneseq
        %v223 = vshrl.u32 %v222, 7
        %v224 = vsub.s32 0, %v223
        %v225 = vrot.slane %v215, %v224
        %v226 = vmul.f32 %v205, %v221
        %v227 = vmul.f32 %v205, %v225
        %228 = vset.pattern.permute.xlu0 1
        %229 = vperm.xlu0 %228, %v201
        %v230 = vpop.permute.xlu0 %229
        %v232 = vlaneseq
        %v233 = vshrl.u32 %v232, 7
        %v234 = vsub.s32 1, %v233
        %v235 = vrot.slane %v200, %v234
        %v236 = vlaneseq
        %v237 = vshrl.u32 %v236, 7
        %v238 = vsub.s32 5, %v237
        %v239 = vrot.slane %v200, %v238
        %v242 = vlaneseq
        %v243 = vshrl.u32 %v242, 7
        %v244 = vsub.s32 1, %v243
        %v245 = vrot.slane %v235, %v244
        %v246 = vlaneseq
        %v247 = vshrl.u32 %v246, 7
        %v248 = vsub.s32 1, %v247
        %v249 = vrot.slane %v239, %v248
        %v250 = vmul.f32 %v230, %v245
        %v251 = vmul.f32 %v230, %v249
        %v252 = vadd.f32 %v226, %v250
        %v253 = vadd.f32 %v227, %v251
        %254 = vset.pattern.permute.xlu0 2
        %255 = vperm.xlu0 %254, %v201
        %v256 = vpop.permute.xlu0 %255
        %v258 = vlaneseq
        %v259 = vshrl.u32 %v258, 7
        %v260 = vsub.s32 2, %v259
        %v261 = vrot.slane %v200, %v260
        %v262 = vlaneseq
        %v263 = vshrl.u32 %v262, 7
        %v264 = vsub.s32 6, %v263
        %v265 = vrot.slane %v200, %v264
        %v268 = vlaneseq
        %v269 = vshrl.u32 %v268, 7
        %v270 = vsub.s32 2, %v269
        %v271 = vrot.slane %v261, %v270
        %v272 = vlaneseq
        %v273 = vshrl.u32 %v272, 7
        %v274 = vsub.s32 2, %v273
        %v275 = vrot.slane %v265, %v274
        %v276 = vmul.f32 %v256, %v271
        %v277 = vmul.f32 %v256, %v275
        %v278 = vadd.f32 %v252, %v276
        %v279 = vadd.f32 %v253, %v277
        %280 = vset.pattern.permute.xlu0 3
        %281 = vperm.xlu0 %280, %v201
        %v282 = vpop.permute.xlu0 %281
        %v284 = vlaneseq
        %v285 = vshrl.u32 %v284, 7
        %v286 = vsub.s32 3, %v285
        %v287 = vrot.slane %v200, %v286
        %v288 = vlaneseq
        %v289 = vshrl.u32 %v288, 7
        %v290 = vsub.s32 7, %v289
        %v291 = vrot.slane %v200, %v290
        %v294 = vlaneseq
        %v295 = vshrl.u32 %v294, 7
        %v296 = vsub.s32 3, %v295
        %v297 = vrot.slane %v287, %v296
        %v298 = vlaneseq
        %v299 = vshrl.u32 %v298, 7
        %v300 = vsub.s32 3, %v299
        %v301 = vrot.slane %v291, %v300
        %v302 = vmul.f32 %v282, %v297
        %v303 = vmul.f32 %v282, %v301
        %v304 = vadd.f32 %v278, %v302
        %v305 = vadd.f32 %v279, %v303
        %v306 = vld [vmem:[%s2] sm:$0xff]
        %308 = vset.pattern.permute.xlu0 0
        %309 = vperm.xlu0 %308, %v306
        %v310 = vpop.permute.xlu0 %309
        %v312 = vadd.f32 %v304, %v310
        %v313 = vadd.f32 %v305, %v310
        %314 = vst [vmem:[%s188] sm:$0xff] %v312
        %315 = vst [vmem:[%s188 + $0x8] sm:$0xff] %v313
        %s316 = sand.u32 %s109, 1
        %s317 = scalar_lea.sflag [#allocation3], %s316
        %s318 = sand.u32 %s109, 1
        %s319 = smul.addr %s318, 16
        %s320 = scalar_lea.vmem [#allocation2], %s319
        // Predicated region
        $region33: #{tpu_custom_call.1} parent=31 // pred_check
          %p321 = pneg %p119
        $region34: #{tpu_custom_call.1} parent=31 // pred_check_branch
          %323 = sbr.rel (%p321) target = $region36
        $region35: #{tpu_custom_call.1} parent=31 // pred_region
          %s324 = smul.u32 2, %s22
          %s326 = ssub.s32 256, 256
          %327 = vsyncadd %s317, %s326
          %s328 = smul.addr %s21, 2
          %s329 = sadd.s32 %s324, %s328
          %s330 = smul.addr %s329, 128
          %s331 = scalar_lea.hbm %s3, %s330
          %s333 = sshll.u32 %s320, 4
          %s334 = int_to_ptr.vmem [resolvable:$true] %s333
          %336 = dma.vmem_to_hbm [thread:$0]  %s334, 256, %s331, %s317
        $region36: #{tpu_custom_call.1} parent=31 // pred_fallthru
          _
      $region32: #{tpu_custom_call.1} parent=5 // pred_fallthru
        _
      %p337 = scmp.le.s32.totalorder 2, %s12
      // Predicated region
      $region37: #{tpu_custom_call.1} parent=5 // pred_check
        %p338 = pneg %p337
      $region38: #{tpu_custom_call.1} parent=5 // pred_check_branch
        %340 = sbr.rel (%p338) target = $region40
      $region39: #{tpu_custom_call.1} parent=5 // pred_region
        %s341 = ssub.s32 %s12, 2
        // Predicated region
        $region41: #{tpu_custom_call.1} parent=39 // pred_check
          %p342 = pneg %p125
        $region42: #{tpu_custom_call.1} parent=39 // pred_check_branch
          %344 = sbr.rel (%p342) target = $region44
        $region43: #{tpu_custom_call.1} parent=39 // pred_region
          %s345 = sand.u32 %s110, 1
          %s346 = scalar_lea.sflag [#allocation3], %s345
          %s347 = sand.u32 %s110, 1
          %s348 = smul.addr %s347, 16
          %s349 = scalar_lea.vmem [#allocation2], %s348
          %350 = dma.done %s346, 256
        $region44: #{tpu_custom_call.1} parent=39 // pred_fallthru
          _
      $region40: #{tpu_custom_call.1} parent=5 // pred_fallthru
        _
    $region6: #{tpu_custom_call.1} parent=1 // loop_footer
      %s16 = sadd.s32 1, %s12
    $region7: #{tpu_custom_call.1} parent=1 // loop_footer_branch
      %11 = sbr.rel target = $region3
    $region8: #{tpu_custom_call.1} parent=1 // loop_exit
      _
    %351 = vsyncpa [#allocation3], 1
    %s352 = scalar_lea.sflag [#allocation3], 1
    %353 = vsyncpa %s352, 1

</llo_original>
